<compile_context>
chip_gen: v7x
topology: tpu7x:2x2x1
jax: 0.10.0
libtpu: 0.0.40
codegen_flags: <defaults>
</compile_context>

<pallas_src>
import math
import functools

import jax
import jax.numpy as jnp
import numpy as np
from jax.experimental import pallas as pl
from jax.experimental.pallas import tpu as pltpu

_INV_SQRT2 = 0.7071067811865476
_VMEM_LIMIT = 48 * 1024 * 1024   # explicit scoped-VMEM budget (fits v7x's 64 MiB)


def _round_up(x, m):
    return ((x + m - 1) // m) * m


def _erf(x):
    # Abramowitz & Stegun 7.1.26 polynomial erf (|abs err| < 1.5e-7); only ops
    # Mosaic lowers cheaply (exp on EUP, mul/add/select on VPU).
    # TODO(synk): a tanh-approx GELU would shave a few VPU ops but drifts ~1e-3
    # from the exact-erf reference, so the exact polynomial is kept.
    a1, a2, a3, a4, a5 = 0.254829592, -0.284496736, 1.421413741, -1.453152027, 1.061405429
    p = 0.3275911
    sgn = jnp.where(x >= 0.0, 1.0, -1.0)
    ax = jnp.abs(x)
    t = 1.0 / (1.0 + p * ax)
    poly = ((((a5 * t + a4) * t + a3) * t + a2) * t + a1) * t
    return sgn * (1.0 - poly * jnp.exp(-ax * ax))


def _gelu_exact(x):
    # nn.GELU() default = exact (erf) gelu; 1/sqrt(2) folded into a constant mul.
    return 0.5 * x * (1.0 + _erf(x * _INV_SQRT2))


# ---------------------------------------------------------------------------
# Kernel 1: strided conv1d in NTC layout as ceil(K/stride) shifted matmuls,
# optional fused exact-GELU epilogue.
# ---------------------------------------------------------------------------
def _conv_ntc_kernel(cur_ref, halo_ref, w_ref, o_ref, slab_ref, *,
                     n_q, use_cols, apply_gelu):
    # cur_ref : (1, T_tile, S)        current tile of the super-row view
    # halo_ref: (1, halo_rows, S)     first super-rows of the *next* tile
    # w_ref   : (n_q, S, C_out)       per-shift weight slabs (VMEM resident)
    # o_ref   : (1, T_tile, C_out)
    # slab_ref: (T_tile + halo_rows, S) scratch so every shifted tap window is a
    #           plain contiguous sublane slice.
    t_tile = cur_ref.shape[1]
    halo_rows = halo_ref.shape[1]
    s = cur_ref.shape[2]

    slab_ref[pl.ds(0, t_tile), :] = cur_ref[0]
    slab_ref[pl.ds(t_tile, halo_rows), :] = halo_ref[0]

    acc = None
    for q in range(n_q):
        cols = use_cols if q == n_q - 1 else s
        if cols == s:
            xq = slab_ref[pl.ds(q, t_tile), :]
            wq = w_ref[q]
        else:
            xq = slab_ref[pl.ds(q, t_tile), :cols]
            wq = w_ref[q, :cols, :]
        part = jnp.dot(xq, wq, preferred_element_type=jnp.float32)
        acc = part if acc is None else acc + part

    if apply_gelu:
        acc = _gelu_exact(acc)
    o_ref[0] = acc.astype(o_ref.dtype)


def conv1d_ntc_pallas(x, w, stride, *, apply_gelu, t_tile=256, compute_dtype=None):
    """Strided 1-D conv, NTC layout.  x: (B, T_in, C_in), w: (C_out, C_in, K)."""
    B, T_in, C_in = x.shape
    C_out, _, K = w.shape
    T_out = (T_in - K) // stride + 1
    assert T_out >= 1, (T_in, K, stride)

    n_q = -(-K // stride)                       # number of shifted matmuls
    extra = n_q - 1                             # super-row halo into the next tile
    S = stride * C_in                           # super-row width
    last_cols = (K - (n_q - 1) * stride) * C_in
    # Only slice the final (partial) shift when the slice is lane-aligned; else
    # contract the zero-padded tap columns (exact, slightly more MXU work).
    use_cols = last_cols if (last_cols == S or last_cols % 128 == 0) else S

    halo_rows = max(8, _round_up(extra, 8))
    tile_cap = max(halo_rows, (t_tile // halo_rows) * halo_rows)
    T_tile = min(_round_up(T_out, halo_rows), tile_cap)
    num_t = -(-T_out // T_tile)
    T_out_pad = num_t * T_tile

    # Zero-pad time so it reshapes exactly into super-rows and the last tile's
    # halo block is fully in bounds; the reshape itself is free (row-major).
    T_super_pad = T_out_pad + halo_rows
    T_in_pad = T_super_pad * stride
    x_pad = jnp.pad(x, ((0, 0), (0, T_in_pad - T_in), (0, 0)))
    x_super = x_pad.reshape(B, T_super_pad, S)

    # Weights -> (n_q, S, C_out), W[q, m*C_in + ci, co] = w[co, ci, q*stride + m].
    w_pad = jnp.pad(w, ((0, 0), (0, 0), (0, n_q * stride - K)))
    w_q = jnp.transpose(w_pad, (2, 1, 0)).reshape(n_q, S, C_out)

    if compute_dtype is not None:
        # Optional bf16 MXU path (v6e/v7x): halves DMA bytes, ~3x MXU throughput.
        x_super = x_super.astype(compute_dtype)
        w_q = w_q.astype(compute_dtype)

    halo_idx = T_tile // halo_rows              # static: halo block index stride

    cost = pl.CostEstimate(
        flops=2 * B * T_out_pad * C_in * K * C_out,
        transcendentals=(B * T_out_pad * C_out) if apply_gelu else 0,
        bytes_accessed=(x_super.size + w_q.size) * x_super.dtype.itemsize
        + B * T_out_pad * C_out * x.dtype.itemsize,
    )

    out = pl.pallas_call(
        functools.partial(_conv_ntc_kernel, n_q=n_q, use_cols=use_cols,
                          apply_gelu=apply_gelu),
        out_shape=jax.ShapeDtypeStruct((B, T_out_pad, C_out), x.dtype),
        grid=(B, num_t),
        in_specs=[
            pl.BlockSpec((1, T_tile, S), lambda b, t: (b, t, 0)),
            pl.BlockSpec((1, halo_rows, S), lambda b, t: (b, (t + 1) * halo_idx, 0)),
            pl.BlockSpec((n_q, S, C_out), lambda b, t: (0, 0, 0)),
        ],
        out_specs=pl.BlockSpec((1, T_tile, C_out), lambda b, t: (b, t, 0)),
        scratch_shapes=[pltpu.VMEM((T_tile + halo_rows, S), x_super.dtype)],
        compiler_params=pltpu.CompilerParams(
            dimension_semantics=("parallel", "parallel"),
            vmem_limit_bytes=_VMEM_LIMIT),
        cost_estimate=cost,
    )(x_super, x_super, w_q)
    return out[:, :T_out, :]


# ---------------------------------------------------------------------------
# Kernel 2: Fp32GroupNorm(dim, dim, affine=True) + exact GELU, fused, NTC.
# num_groups == num_channels => per-(batch, channel) normalization over time,
# eps=1e-5, biased variance, affine, then GELU.  Tiled over channels.
# ---------------------------------------------------------------------------
def _groupnorm_gelu_kernel(x_ref, g_ref, b_ref, o_ref):
    # x_ref: (1, T, C_tile)   g_ref/b_ref: (1, C_tile)   o_ref: (1, T, C_tile)
    x = x_ref[0].astype(jnp.float32)                  # (T, C_tile)
    mean = jnp.mean(x, axis=0, keepdims=True)
    diff = x - mean
    var = jnp.mean(diff * diff, axis=0, keepdims=True)
    xhat = diff * jax.lax.rsqrt(var + 1e-5)
    y = xhat * g_ref[...] + b_ref[...]
    o_ref[0] = _gelu_exact(y).astype(o_ref.dtype)


def groupnorm_gelu_pallas(x, gamma, beta):
    """x: (B, T, C), gamma/beta: (1, C) -> (B, T, C)."""
    B, T, C = x.shape
    c_tile = 128 if C % 128 == 0 else C
    num_c = C // c_tile

    cost = pl.CostEstimate(
        flops=10 * B * T * C,
        transcendentals=B * T * C,
        bytes_accessed=2 * B * T * C * x.dtype.itemsize + 2 * C * 4,
    )
    return pl.pallas_call(
        _groupnorm_gelu_kernel,
        out_shape=jax.ShapeDtypeStruct((B, T, C), x.dtype),
        grid=(B, num_c),
        in_specs=[
            pl.BlockSpec((1, T, c_tile), lambda b, c: (b, 0, c)),
            pl.BlockSpec((1, c_tile), lambda b, c: (0, c)),
            pl.BlockSpec((1, c_tile), lambda b, c: (0, c)),
        ],
        out_specs=pl.BlockSpec((1, T, c_tile), lambda b, c: (b, 0, c)),
        compiler_params=pltpu.CompilerParams(
            dimension_semantics=("parallel", "parallel"),
            vmem_limit_bytes=_VMEM_LIMIT),
        cost_estimate=cost,
    )(x, gamma, beta)


# ---------------------------------------------------------------------------
# Module: parameter init + forward.
# ---------------------------------------------------------------------------
def init_params(key, conv_layers, *, first_conv=True):
    in_d = 1 if first_conv else 768
    params = []
    for i, (dim, k, stride) in enumerate(conv_layers):
        key, sub = jax.random.split(key)
        std = math.sqrt(2.0 / (in_d * k))  # kaiming_normal_, fan_in, gain=sqrt(2)
        w = std * jax.random.normal(sub, (dim, in_d, k), dtype=jnp.float32)
        layer = {"w": w, "stride": stride}
        if i == 0:   # mode='default' -> GroupNorm only on the first block
            layer["gn_gamma"] = jnp.ones((1, dim), jnp.float32)   # PyTorch default init
            layer["gn_beta"] = jnp.zeros((1, dim), jnp.float32)
        params.append(layer)
        in_d = dim
    return params


def conv_feature_extraction_forward(params, x, *, compute_dtype=None):
    # x: (B, T) raw waveform (or (B, C, T)); internally NTC, returns NCT like torch.
    if x.ndim == 2:
        x = x[:, :, None]                      # (B, T, 1)
    else:
        x = jnp.transpose(x, (0, 2, 1))        # NCT -> NTC
    for layer in params:
        has_gn = "gn_gamma" in layer
        # Dropout(p=0.0) is identity; conv_bias=False.
        x = conv1d_ntc_pallas(x, layer["w"], layer["stride"],
                              apply_gelu=not has_gn, compute_dtype=compute_dtype)
        if has_gn:
            x = groupnorm_gelu_pallas(x, layer["gn_gamma"], layer["gn_beta"])
    return jnp.transpose(x, (0, 2, 1))         # NTC -> NCT (module output layout)


# ---------------------------------------------------------------------------
# Pure-JAX reference (sanity check).
# ---------------------------------------------------------------------------
def _reference_forward(params, x):
    if x.ndim == 2:
        x = x[:, None, :]
    for layer in params:
        y = jax.lax.conv_general_dilated(
            x, layer["w"], window_strides=(layer["stride"],), padding="VALID",
            dimension_numbers=("NCH", "OIH", "NCH"))
        if "gn_gamma" in layer:
            mean = jnp.mean(y, axis=-1, keepdims=True)
            var = jnp.mean((y - mean) ** 2, axis=-1, keepdims=True)
            y = (y - mean) * jax.lax.rsqrt(var + 1e-5)
            y = (y * layer["gn_gamma"].reshape(1, -1, 1)
                 + layer["gn_beta"].reshape(1, -1, 1))
        x = jax.nn.gelu(y, approximate=False)
    return x


if __name__ == "__main__":
    # Small wav2vec2-style config: layer 0 (k=10, s=5, GroupNorm), then two
    # (k=3, s=2) blocks; exercises both the full-width and lane-aligned-slice
    # tap paths of the conv kernel.
    conv_layers = [(32, 10, 5), (128, 3, 2), (128, 3, 2)]
    key = jax.random.PRNGKey(0)
    pkey, xkey = jax.random.split(key)
    params = init_params(pkey, conv_layers, first_conv=True)

    B, T = 2, 256
    x = jax.random.normal(xkey, (B, T), dtype=jnp.float32)

    out = jax.block_until_ready(conv_feature_extraction_forward(params, x))
    ref = jax.block_until_ready(_reference_forward(params, x))

    assert out.shape == ref.shape, (out.shape, ref.shape)
    assert np.allclose(np.asarray(out), np.asarray(ref), rtol=2e-3, atol=2e-3), (
        "mismatch vs reference")

    print("KERNEL_OK")
</pallas_src>

<mosaic_0001>
module attributes {stable_mosaic.version = 11 : i64} {
  func.func @_conv_ntc_kernel(%arg0: i32, %arg1: i32, %arg2: memref<1x56x5xf32, #tpu.memory_space<vmem>>, %arg3: memref<1x8x5xf32, #tpu.memory_space<vmem>>, %arg4: memref<2x5x32xf32, #tpu.memory_space<vmem>>, %arg5: memref<1x56x32xf32, #tpu.memory_space<vmem>>, %arg6: memref<64x5xf32, #tpu.memory_space<vmem>>) attributes {dimension_semantics = [#tpu.dimension_semantics<parallel>, #tpu.dimension_semantics<parallel>], iteration_bounds = array<i64: 2, 1>, scalar_prefetch = 0 : i64, scratch_operands = 1 : i64, tpu.core_type = #tpu.core_type<tc>, window_params = [{transform_indices = @transform_0, window_bounds = array<i64: 1, 56, 5>}, {transform_indices = @transform_1, window_bounds = array<i64: 1, 8, 5>}, {pipeline_mode = #tpu.pipeline_mode<synchronous>, transform_indices = @transform_2, window_bounds = array<i64: 2, 5, 32>}, {transform_indices = @transform_3, window_bounds = array<i64: 1, 56, 32>}]} {
    %c0 = arith.constant 0 : index
    %c0_0 = arith.constant 0 : index
    %c0_1 = arith.constant 0 : index
    %0 = vector.load %arg2[%c0, %c0_0, %c0_1] : memref<1x56x5xf32, #tpu.memory_space<vmem>>, vector<1x56x5xf32>
    %1 = vector.shape_cast %0 : vector<1x56x5xf32> to vector<56x5xf32>
    %c0_2 = arith.constant 0 : index
    %c0_3 = arith.constant 0 : index
    %2 = vector.load %arg6[%c0_2, %c0_3] : memref<64x5xf32, #tpu.memory_space<vmem>>, vector<56x5xf32>
    tpu.vector_store %arg6[%c0_2, %c0_3], %1 {strides = array<i32>} : memref<64x5xf32, #tpu.memory_space<vmem>>, vector<56x5xf32>,
    %c0_4 = arith.constant 0 : index
    %c0_5 = arith.constant 0 : index
    %c0_6 = arith.constant 0 : index
    %3 = vector.load %arg3[%c0_4, %c0_5, %c0_6] : memref<1x8x5xf32, #tpu.memory_space<vmem>>, vector<1x8x5xf32>
    %4 = vector.shape_cast %3 : vector<1x8x5xf32> to vector<8x5xf32>
    %c56 = arith.constant 56 : index
    %c0_7 = arith.constant 0 : index
    %5 = vector.load %arg6[%c56, %c0_7] : memref<64x5xf32, #tpu.memory_space<vmem>>, vector<8x5xf32>
    tpu.vector_store %arg6[%c56, %c0_7], %4 {strides = array<i32>} : memref<64x5xf32, #tpu.memory_space<vmem>>, vector<8x5xf32>,
    %c0_8 = arith.constant 0 : index
    %c0_9 = arith.constant 0 : index
    %6 = vector.load %arg6[%c0_8, %c0_9] : memref<64x5xf32, #tpu.memory_space<vmem>>, vector<56x5xf32>
    %c0_10 = arith.constant 0 : index
    %c0_11 = arith.constant 0 : index
    %c0_12 = arith.constant 0 : index
    %7 = vector.load %arg4[%c0_10, %c0_11, %c0_12] : memref<2x5x32xf32, #tpu.memory_space<vmem>>, vector<1x5x32xf32>
    %8 = vector.shape_cast %7 : vector<1x5x32xf32> to vector<5x32xf32>
    %cst = arith.constant dense<0.000000e+00> : vector<56x32xf32>
    %9 = tpu.matmul %6, %8, %cst {dimension_numbers = #tpu.dot_dimension_numbers<[1], [0], [0], [1], [0, 0, 1, 1], [], []>} : vector<56x5xf32>, vector<5x32xf32>, vector<56x32xf32> -> vector<56x32xf32>
    %c1 = arith.constant 1 : index
    %c0_13 = arith.constant 0 : index
    %10 = vector.load %arg6[%c1, %c0_13] : memref<64x5xf32, #tpu.memory_space<vmem>>, vector<56x5xf32>
    %c1_14 = arith.constant 1 : index
    %c0_15 = arith.constant 0 : index
    %c0_16 = arith.constant 0 : index
    %11 = vector.load %arg4[%c1_14, %c0_15, %c0_16] : memref<2x5x32xf32, #tpu.memory_space<vmem>>, vector<1x5x32xf32>
    %12 = vector.shape_cast %11 : vector<1x5x32xf32> to vector<5x32xf32>
    %cst_17 = arith.constant dense<0.000000e+00> : vector<56x32xf32>
    %13 = tpu.matmul %10, %12, %cst_17 {dimension_numbers = #tpu.dot_dimension_numbers<[1], [0], [0], [1], [0, 0, 1, 1], [], []>} : vector<56x5xf32>, vector<5x32xf32>, vector<56x32xf32> -> vector<56x32xf32>
    %14 = arith.addf %9, %13 : vector<56x32xf32>
    %c0_18 = arith.constant 0 : index
    %c0_19 = arith.constant 0 : index
    %c0_20 = arith.constant 0 : index
    %15 = vector.load %arg5[%c0_18, %c0_19, %c0_20] : memref<1x56x32xf32, #tpu.memory_space<vmem>>, vector<1x56x32xf32>
    %16 = vector.shape_cast %15 : vector<1x56x32xf32> to vector<56x32xf32>
    %17 = vector.shape_cast %14 : vector<56x32xf32> to vector<1x56x32xf32>
    tpu.vector_store %arg5[%c0_18, %c0_19, %c0_20], %17 {strides = array<i32>} : memref<1x56x32xf32, #tpu.memory_space<vmem>>, vector<1x56x32xf32>,
    return
  }
  func.func @transform_0(%arg0: i32, %arg1: i32) -> (i32, i32, i32) {
    %c0_i32 = arith.constant 0 : i32
    %c0_i32_0 = arith.constant 0 : i32
    return %arg0, %arg1, %c0_i32 : i32, i32, i32
  }
  func.func @transform_1(%arg0: i32, %arg1: i32) -> (i32, i32, i32) {
    %c1_i32 = arith.constant 1 : i32
    %0 = arith.addi %arg1, %c1_i32 : i32
    %c7_i32 = arith.constant 7 : i32
    %1 = arith.muli %0, %c7_i32 : i32
    %c0_i32 = arith.constant 0 : i32
    %c0_i32_0 = arith.constant 0 : i32
    return %arg0, %1, %c0_i32 : i32, i32, i32
  }
  func.func @transform_2(%arg0: i32, %arg1: i32) -> (i32, i32, i32) {
    %c0_i32 = arith.constant 0 : i32
    %c0_i32_0 = arith.constant 0 : i32
    %c0_i32_1 = arith.constant 0 : i32
    %c0_i32_2 = arith.constant 0 : i32
    return %c0_i32, %c0_i32_0, %c0_i32_1 : i32, i32, i32
  }
  func.func @transform_3(%arg0: i32, %arg1: i32) -> (i32, i32, i32) {
    %c0_i32 = arith.constant 0 : i32
    %c0_i32_0 = arith.constant 0 : i32
    return %arg0, %arg1, %c0_i32 : i32, i32, i32
  }
}

</mosaic_0001>

<llo_original>
// kernel: tpu_custom_call.1
$region0: #{tpu_custom_call.1}
  #allocation0 [shape = 'u32[]', space=smem, size = 0x4, offset = 0x4, fixed_abs, tag = 'smem constant byte address 0x4 - core index']
  #allocation1 [shape = 'u32[144,128]{1,0:T(1,128)}', space=vmem, size = 0x12000, scoped, tag = 'internal scratch']
  #allocation2 [shape = 'f32[64,5]{1,0:T(8,128)}', space=vmem, size = 0x8000, scoped, tag = 'scratch operand']
  %s0 = inlined_call_operand.vmem [shape: f32[2,64,5], index: 0, kind: input, shape index: {}]
  %s1 = inlined_call_operand.vmem [shape: f32[2,64,5], index: 1, kind: input, shape index: {}]
  %s2 = inlined_call_operand.vmem [shape: f32[2,5,32], index: 2, kind: input, shape index: {}]
  %s3 = inlined_call_operand.vmem [shape: f32[2,56,32], index: 3, kind: output, shape index: {}]
  %s4 = sld [smem:[#allocation0]]
  $region45: #{tpu_custom_call.1} parent=0
    _
  %s6 = ssub.s32 1, %s4
  %s7 = scalar_select 0, %s6, %s4
  loop: start=0, step=1, limit=4
  $region2: #{tpu_custom_call.1} parent=0 // loop_pre_header
    _
  $region3: #{tpu_custom_call.1} parent=0 // loop_header
    %s9 = sphi 0, %s13
    %p10 = scmp.ge.s32.totalorder %s9, 4
    %s16 = sphi 0, %s28
    %s17 = sphi 0, %s24
    %s18 = sphi 0, %s16
    %s19 = sphi 0, %s17
    %s20 = sphi 0, %s18
    %s21 = sphi 0, %s19
    %s33 = sphi 0, %s35
    %s36 = sphi 0, %s33
    %s37 = sphi 0, %s36
    %s53 = sphi 0, %s37
    %s65 = sphi 0, %s67
    %s68 = sphi 0, %s65
    %s69 = sphi 0, %s68
    %s85 = sphi 0, %s69
    %s89 = sphi 0, %s89
    %s91 = sphi 0, %s89
    %s92 = sphi 0, %s91
    %s106 = sphi 0, %s92
    %s114 = sphi 0, %s116
    %s117 = sphi 0, %s114
    %s118 = sphi 0, %s117
    %s134 = sphi 0, %s118
  $region4: #{tpu_custom_call.1} parent=0 // loop_header_branch
    %12 = sbr.rel (%p10) target = $region8
  $region5: #{tpu_custom_call.1} parent=0 // loop_body
    %s14 = ssub.s32 %s9, 1
    %s15 = ssub.s32 %s9, 2
    %s22 = sadd.s32 1, %s17
    %p23 = scmp.ge.s32.totalorder %s22, 1
    %s24 = scalar_select %p23, 0, %s22
    %s25 = sadd.s32 1, %s16
    %s26 = scalar_select %p23, %s25, %s16
    %p27 = scmp.ge.s32.totalorder %s26, 2
    %s28 = scalar_select %p27, 0, %s26
    %s29 = ssub.s32 %s16, %s28
    %s30 = ssub.s32 %s17, %s24
    %s31 = sor.u32 %s29, %s30
    %p32 = scmp.eq.s32.totalorder %s31, 0
    %s34 = sadd.s32 %s33, 1
    %s35 = scalar_select %p32, %s33, %s34
    %p38 = pneg %p32
    %p39 = scmp.eq.s32.totalorder %s9, 1
    %p40 = por %p38, %p39
    %p41 = scmp.ne.s32.totalorder %s33, %s36
    %p42 = scmp.eq.s32.totalorder %s9, 0
    %p43 = por %p41, %p42
    %p44 = scmp.ne.s32.totalorder %s33, %s36
    %p45 = scmp.eq.s32.totalorder %s14, 1
    %p46 = por %p44, %p45
    %p47 = scmp.ne.s32.totalorder %s36, %s37
    %p48 = scmp.eq.s32.totalorder %s14, 0
    %p49 = por %p47, %p48
    %p50 = scmp.ne.s32.totalorder %s36, %s37
    %p51 = scmp.eq.s32.totalorder %s15, 1
    %p52 = por %p50, %p51
    %p54 = scmp.ne.s32.totalorder %s37, %s53
    %p55 = scmp.eq.s32.totalorder %s15, 0
    %p56 = por %p54, %p55
    %s57 = sadd.s32 %s17, 1
    %s58 = smul.u32 %s57, 7
    %s59 = sadd.s32 %s24, 1
    %s60 = smul.u32 %s59, 7
    %s61 = ssub.s32 %s16, %s28
    %s62 = ssub.s32 %s58, %s60
    %s63 = sor.u32 %s61, %s62
    %p64 = scmp.eq.s32.totalorder %s63, 0
    %s66 = sadd.s32 %s65, 1
    %s67 = scalar_select %p64, %s65, %s66
    %p70 = pneg %p64
    %p71 = scmp.eq.s32.totalorder %s9, 1
    %p72 = por %p70, %p71
    %p73 = scmp.ne.s32.totalorder %s65, %s68
    %p74 = scmp.eq.s32.totalorder %s9, 0
    %p75 = por %p73, %p74
    %p76 = scmp.ne.s32.totalorder %s65, %s68
    %p77 = scmp.eq.s32.totalorder %s14, 1
    %p78 = por %p76, %p77
    %p79 = scmp.ne.s32.totalorder %s68, %s69
    %p80 = scmp.eq.s32.totalorder %s14, 0
    %p81 = por %p79, %p80
    %p82 = scmp.ne.s32.totalorder %s68, %s69
    %p83 = scmp.eq.s32.totalorder %s15, 1
    %p84 = por %p82, %p83
    %p86 = scmp.ne.s32.totalorder %s69, %s85
    %p87 = scmp.eq.s32.totalorder %s15, 0
    %p88 = por %p86, %p87
    %s90 = sadd.s32 %s89, 1
    %p93 = scmp.eq.s32.totalorder %s9, 1
    %p94 = scmp.ne.s32.totalorder %s89, %s91
    %p95 = scmp.eq.s32.totalorder %s9, 0
    %p96 = por %p94, %p95
    %p97 = scmp.ne.s32.totalorder %s89, %s91
    %p98 = scmp.eq.s32.totalorder %s14, 1
    %p99 = por %p97, %p98
    %p100 = scmp.ne.s32.totalorder %s91, %s92
    %p101 = scmp.eq.s32.totalorder %s14, 0
    %p102 = por %p100, %p101
    %p103 = scmp.ne.s32.totalorder %s91, %s92
    %p104 = scmp.eq.s32.totalorder %s15, 1
    %p105 = por %p103, %p104
    %p107 = scmp.ne.s32.totalorder %s92, %s106
    %p108 = scmp.eq.s32.totalorder %s15, 0
    %p109 = por %p107, %p108
    %s110 = ssub.s32 %s16, %s28
    %s111 = ssub.s32 %s17, %s24
    %s112 = sor.u32 %s110, %s111
    %p113 = scmp.eq.s32.totalorder %s112, 0
    %s115 = sadd.s32 %s114, 1
    %s116 = scalar_select %p113, %s114, %s115
    %p119 = pneg %p113
    %p120 = scmp.eq.s32.totalorder %s9, 1
    %p121 = por %p119, %p120
    %p122 = scmp.ne.s32.totalorder %s114, %s117
    %p123 = scmp.eq.s32.totalorder %s9, 0
    %p124 = por %p122, %p123
    %p125 = scmp.ne.s32.totalorder %s114, %s117
    %p126 = scmp.eq.s32.totalorder %s14, 1
    %p127 = por %p125, %p126
    %p128 = scmp.ne.s32.totalorder %s117, %s118
    %p129 = scmp.eq.s32.totalorder %s14, 0
    %p130 = por %p128, %p129
    %p131 = scmp.ne.s32.totalorder %s117, %s118
    %p132 = scmp.eq.s32.totalorder %s15, 1
    %p133 = por %p131, %p132
    %p135 = scmp.ne.s32.totalorder %s118, %s134
    %p136 = scmp.eq.s32.totalorder %s15, 0
    %p137 = por %p135, %p136
    %p138 = scmp.le.s32.totalorder 1, %s9
    %p139 = scmp.lt.s32.totalorder %s9, 3
    %p140 = pnand %p138, %p139
    %p141 = pneg %p140
    // Predicated region
    $region9: #{tpu_custom_call.1} parent=5 // pred_check
      _
    $region10: #{tpu_custom_call.1} parent=5 // pred_check_branch
      %143 = sbr.rel (%p140) target = $region12
    $region11: #{tpu_custom_call.1} parent=5 // pred_region
      %s144 = ssub.s32 %s9, 1
      // Predicated region
      $region13: #{tpu_custom_call.1} parent=11 // pred_check
        %p145 = pneg %p102
      $region14: #{tpu_custom_call.1} parent=11 // pred_check_branch
        %147 = sbr.rel (%p145) target = $region16
      $region15: #{tpu_custom_call.1} parent=11 // pred_region
        _
      $region16: #{tpu_custom_call.1} parent=11 // pred_fallthru
        _
    $region12: #{tpu_custom_call.1} parent=5 // pred_fallthru
      _
    %p148 = scmp.lt.s32.totalorder %s9, 2
    // Predicated region
    $region17: #{tpu_custom_call.1} parent=5 // pred_check
      %p149 = pneg %p148
    $region18: #{tpu_custom_call.1} parent=5 // pred_check_branch
      %151 = sbr.rel (%p149) target = $region20
    $region19: #{tpu_custom_call.1} parent=5 // pred_region
      // Predicated region
      $region21: #{tpu_custom_call.1} parent=19 // pred_check
        %p152 = pneg %p43
      $region22: #{tpu_custom_call.1} parent=19 // pred_check_branch
        %154 = sbr.rel (%p152) target = $region24
      $region23: #{tpu_custom_call.1} parent=19 // pred_region
        %s155 = smul.u32 7, %s17
        %s156 = ssub.s32 8, %s155
        %p157 = scmp.lt.s32.totalorder %s156, 7
        %s158 = scalar_select %p157, %s156, 7
        %s159 = smul.u32 128, %s158
        %p160 = scmp.lt.s32.totalorder %s16, 1
        %s161 = scalar_select %p160, %s16, 1
        %p162 = scmp.lt.s32.totalorder %s155, 7
        %s163 = scalar_select %p162, %s155, 7
        %s164 = smul.addr %s161, 8
        %s165 = sadd.s32 %s163, %s164
        %s166 = smul.addr %s165, 8
        %s167 = scalar_lea.vmem %s0, %s166
        %s168 = smul.u32 7, %s17
        %s169 = ssub.s32 8, %s168
        %p170 = scmp.lt.s32.totalorder %s169, 7
        %s171 = scalar_select %p170, %s169, 7
        %s172 = smul.u32 128, %s171
      $region24: #{tpu_custom_call.1} parent=19 // pred_fallthru
        _
      // Predicated region
      $region25: #{tpu_custom_call.1} parent=19 // pred_check
        %p173 = pneg %p75
      $region26: #{tpu_custom_call.1} parent=19 // pred_check_branch
        %175 = sbr.rel (%p173) target = $region28
      $region27: #{tpu_custom_call.1} parent=19 // pred_region
        %s176 = sadd.s32 %s17, 1
        %s177 = smul.u32 %s176, 7
        %p178 = scmp.lt.s32.totalorder %s16, 1
        %s179 = scalar_select %p178, %s16, 1
        %p180 = scmp.lt.s32.totalorder %s177, 7
        %s181 = scalar_select %p180, %s177, 7
        %s182 = smul.addr %s179, 8
        %s183 = sadd.s32 %s181, %s182
        %s184 = smul.addr %s183, 8
        %s185 = scalar_lea.vmem %s1, %s184
        %s186 = sadd.s32 %s17, 1
        %s187 = smul.u32 %s186, 7
      $region28: #{tpu_custom_call.1} parent=19 // pred_fallthru
        _
    $region20: #{tpu_custom_call.1} parent=5 // pred_fallthru
      _
    %p188 = scmp.le.s32.totalorder 1, %s9
    %p189 = scmp.lt.s32.totalorder %s9, 3
    %p190 = pnand %p188, %p189
    %p191 = pneg %p190
    // Predicated region
    $region29: #{tpu_custom_call.1} parent=5 // pred_check
      _
    $region30: #{tpu_custom_call.1} parent=5 // pred_check_branch
      %193 = sbr.rel (%p190) target = $region32
    $region31: #{tpu_custom_call.1} parent=5 // pred_region
      %s194 = ssub.s32 %s9, 1
      %s195 = smul.u32 7, %s19
      %s196 = ssub.s32 8, %s195
      %p197 = scmp.lt.s32.totalorder %s196, 7
      %s198 = scalar_select %p197, %s196, 7
      %s199 = smul.u32 128, %s198
      %p200 = scmp.lt.s32.totalorder %s18, 1
      %s201 = scalar_select %p200, %s18, 1
      %p202 = scmp.lt.s32.totalorder %s195, 7
      %s203 = scalar_select %p202, %s195, 7
      %s204 = smul.addr %s201, 8
      %s205 = sadd.s32 %s203, %s204
      %s206 = smul.addr %s205, 8
      %s207 = scalar_lea.vmem %s0, %s206
      %p208 = pneg %p49
      %p209 = pneg %p46
      %s210 = sadd.s32 %s19, 1
      %s211 = smul.u32 %s210, 7
      %p212 = scmp.lt.s32.totalorder %s18, 1
      %s213 = scalar_select %p212, %s18, 1
      %p214 = scmp.lt.s32.totalorder %s211, 7
      %s215 = scalar_select %p214, %s211, 7
      %s216 = smul.addr %s213, 8
      %s217 = sadd.s32 %s215, %s216
      %s218 = smul.addr %s217, 8
      %s219 = scalar_lea.vmem %s1, %s218
      %p220 = pneg %p81
      %p221 = pneg %p78
      %p222 = pneg %p102
      %p223 = pneg %p99
      %p224 = pneg %p130
      %p225 = pneg %p127
      %s226 = smul.u32 7, %s19
      %p227 = scmp.lt.s32.totalorder %s18, 1
      %s228 = scalar_select %p227, %s18, 1
      %p229 = scmp.lt.s32.totalorder %s226, 6
      %s230 = scalar_select %p229, %s226, 6
      %s231 = smul.addr %s228, 7
      %s232 = sadd.s32 %s230, %s231
      %s233 = smul.addr %s232, 8
      %s234 = scalar_lea.vmem %s3, %s233
      %s235 = smul.u32 7, %s19
      %s236 = ssub.s32 8, %s235
      %p237 = scmp.lt.s32.totalorder %s236, 7
      %s238 = scalar_select %p237, %s236, 7
      %s239 = smul.u32 128, %s238
      %p240 = scmp.lt.s32.totalorder %s18, 1
      %s241 = scalar_select %p240, %s18, 1
      %p242 = scmp.lt.s32.totalorder %s235, 7
      %s243 = scalar_select %p242, %s235, 7
      %s244 = smul.addr %s241, 8
      %s245 = sadd.s32 %s243, %s244
      %s246 = smul.addr %s245, 8
      %s247 = scalar_lea.vmem %s0, %s246
      %s248 = smul.u32 7, %s19
      %s249 = ssub.s32 8, %s248
      %p250 = scmp.lt.s32.totalorder %s249, 7
      %s251 = scalar_select %p250, %s249, 7
      %s252 = smul.u32 128, %s251
      %s253 = sadd.s32 %s19, 1
      %s254 = smul.u32 %s253, 7
      %p255 = scmp.lt.s32.totalorder %s18, 1
      %s256 = scalar_select %p255, %s18, 1
      %p257 = scmp.lt.s32.totalorder %s254, 7
      %s258 = scalar_select %p257, %s254, 7
      %s259 = smul.addr %s256, 8
      %s260 = sadd.s32 %s258, %s259
      %s261 = smul.addr %s260, 8
      %s262 = scalar_lea.vmem %s1, %s261
      %s263 = sadd.s32 %s19, 1
      %s264 = smul.u32 %s263, 7
      %s265 = smul.u32 7, %s19
      %p266 = scmp.lt.s32.totalorder %s18, 1
      %s267 = scalar_select %p266, %s18, 1
      %p268 = scmp.lt.s32.totalorder %s265, 6
      %s269 = scalar_select %p268, %s265, 6
      %s270 = smul.addr %s267, 7
      %s271 = sadd.s32 %s269, %s270
      %s272 = smul.addr %s271, 8
      %s273 = scalar_lea.vmem %s3, %s272
      %s274 = smul.u32 7, %s19
      %v275 = vld [vmem:[%s247] sm:$0xff]
      %v276 = vld [vmem:[%s247 + $0x8] sm:$0xff]
      %v277 = vld [vmem:[%s247 + $0x10] sm:$0xff]
      %v278 = vld [vmem:[%s247 + $0x18] sm:$0xff]
      %v279 = vld [vmem:[%s247 + $0x20] sm:$0xff]
      %v280 = vld [vmem:[%s247 + $0x28] sm:$0xff]
      %v281 = vld [vmem:[%s247 + $0x30] sm:$0xff]
      %vm282 = vcmask 39936
      %283 = vst.msk [vmem:[#allocation2] sm:$0xff] %vm282, %v275
      %284 = vst.msk [vmem:[#allocation2 + $0x8] sm:$0xff] %vm282, %v276
      %285 = vst.msk [vmem:[#allocation2 + $0x10] sm:$0xff] %vm282, %v277
      %286 = vst.msk [vmem:[#allocation2 + $0x18] sm:$0xff] %vm282, %v278
      %287 = vst.msk [vmem:[#allocation2 + $0x20] sm:$0xff] %vm282, %v279
      %288 = vst.msk [vmem:[#allocation2 + $0x28] sm:$0xff] %vm282, %v280
      %289 = vst.msk [vmem:[#allocation2 + $0x30] sm:$0xff] %vm282, %v281
      %v290 = vld [vmem:[%s262] sm:$0xff]
      %291 = vst.msk [vmem:[#allocation2 + $0x38] sm:$0xff] %vm282, %v290
      %v292 = vld [vmem:[#allocation2] sm:$0xff]
      %v293 = vld [vmem:[#allocation2 + $0x8] sm:$0xff]
      %v294 = vld [vmem:[#allocation2 + $0x10] sm:$0xff]
      %v295 = vld [vmem:[#allocation2 + $0x18] sm:$0xff]
      %v296 = vld [vmem:[#allocation2 + $0x20] sm:$0xff]
      %v297 = vld [vmem:[#allocation2 + $0x28] sm:$0xff]
      %v298 = vld [vmem:[#allocation2 + $0x30] sm:$0xff]
      %v299 = vld [vmem:[%s2] sm:$0x1f]
      %v300 = vld [vmem:[#allocation2 + $0x1] sm:$0xff]
      %v301 = vld [vmem:[#allocation2 + $0x9] sm:$0xff]
      %v302 = vld [vmem:[#allocation2 + $0x11] sm:$0xff]
      %v303 = vld [vmem:[#allocation2 + $0x19] sm:$0xff]
      %v304 = vld [vmem:[#allocation2 + $0x21] sm:$0xff]
      %v305 = vld [vmem:[#allocation2 + $0x29] sm:$0xff]
      %v306 = vld [vmem:[#allocation2 + $0x31] sm:$0xff]
      %s307 = scalar_lea.vmem %s2, 8
      %v308 = vld [vmem:[%s307] sm:$0x1f]
      %v310 = vsel %vm282, %v300, 0
      %v313 = vsel %vm282, %v301, 0
      %v316 = vsel %vm282, %v302, 0
      %v319 = vsel %vm282, %v303, 0
      %v322 = vsel %vm282, %v304, 0
      %v325 = vsel %vm282, %v305, 0
      %v328 = vsel %vm282, %v306, 0
      %vm330 = vcmask 1044480
      %v332 = vsel %vm330, %v308, 0
      %334 = vmatprep.subr.mxu0 0.0
      %335 = vmatpush1.msra.mxu0 %v332
      %336 = vmatprep.subr.mxu0 0.0
      %337 = vmatpush1.msra.mxu0 0.0
      %338 = vmatprep.subr.mxu0 0.0
      %339 = vmatpush1.msra.mxu0 0.0
      %340 = vmatprep.subr.mxu0 0.0
      %341 = vmatpush1.msra.mxu0 0.0
      %342 = vmatprep.subr.mxu0 0.0
      %343 = vmatpush1.msra.mxu0 0.0
      %344 = vmatprep.subr.mxu0 0.0
      %345 = vmatpush1.msra.mxu0 0.0
      %346 = vmatprep.subr.mxu0 0.0
      %347 = vmatpush1.msra.mxu0 0.0
      %348 = vmatprep.subr.mxu0 0.0
      %349 = vmatpush1.msra.mxu0 0.0
      %350 = vmatprep.subr.mxu0 0.0
      %351 = vmatpush1.msra.mxu0 0.0
      %352 = vmatprep.subr.mxu0 0.0
      %353 = vmatpush1.msra.mxu0 0.0
      %354 = vmatprep.subr.mxu0 0.0
      %355 = vmatpush1.msra.mxu0 0.0
      %356 = vmatprep.subr.mxu0 0.0
      %357 = vmatpush1.msra.mxu0 0.0
      %358 = vmatprep.subr.mxu0 0.0
      %359 = vmatpush1.msra.mxu0 0.0
      %360 = vmatprep.subr.mxu0 0.0
      %361 = vmatpush1.msra.mxu0 0.0
      %362 = vmatprep.subr.mxu0 0.0
      %363 = vmatpush1.msra.mxu0 0.0
      %364 = vmatprep.subr.mxu0 0.0
      %365 = vmatpush1.msra.mxu0 0.0
      %366 = vmatprep.subr.mxu0 0.0
      %367 = vmatpush1.msra.mxu0 0.0
      %368 = vmatprep.subr.mxu0 0.0
      %369 = vmatpush1.msra.mxu0 0.0
      %370 = vmatprep.subr.mxu0 0.0
      %371 = vmatpush1.msra.mxu0 0.0
      %372 = vmatprep.subr.mxu0 0.0
      %373 = vmatpush1.msra.mxu0 0.0
      %374 = vmatprep.subr.mxu0 0.0
      %375 = vmatpush1.msra.mxu0 0.0
      %376 = vmatprep.subr.mxu0 0.0
      %377 = vmatpush1.msra.mxu0 0.0
      %378 = vmatprep.subr.mxu0 0.0
      %379 = vmatpush1.msra.mxu0 0.0
      %380 = vmatprep.subr.mxu0 0.0
      %381 = vmatpush1.msra.mxu0 0.0
      %382 = vmatprep.subr.mxu0 0.0
      %383 = vmatpush1.msra.mxu0 0.0
      %384 = vmatprep.subr.mxu0 0.0
      %385 = vmatpush1.msra.mxu0 0.0
      %386 = vmatprep.subr.mxu0 0.0
      %387 = vmatpush1.msra.mxu0 0.0
      %388 = vmatprep.subr.mxu0 0.0
      %389 = vmatpush1.msra.mxu0 0.0
      %390 = vmatprep.subr.mxu0 0.0
      %391 = vmatpush1.msra.mxu0 0.0
      %392 = vmatprep.subr.mxu0 0.0
      %393 = vmatpush1.msra.mxu0 0.0
      %394 = vmatprep.subr.mxu0 0.0
      %395 = vmatpush1.msra.mxu0 0.0
      %396 = vmatprep.subr.mxu0 0.0
      %397 = vmatpush1.msra.mxu0 0.0
      %398 = vmatprep.mubr.f32.mxu0 0.0
      %399 = vmatmul.mubr.f32.gmra.mrb[0].mxu0 %v310
      %v400 = vpop.f32.mrb[0].mxu0
      %v401 = vadd.f32 0.0, %v400
      %v402 = vpop.f32.mrb[0].mxu0
      %403 = vmatprep.mubr.f32.mxu0 0.0
      %404 = vmatmul.mubr.f32.gmra.mrb[0].mxu0 %v313
      %v405 = vpop.f32.mrb[0].mxu0
      %v406 = vadd.f32 0.0, %v405
      %v407 = vpop.f32.mrb[0].mxu0
      %408 = vmatprep.mubr.f32.mxu0 0.0
      %409 = vmatmul.mubr.f32.gmra.mrb[0].mxu0 %v316
      %v410 = vpop.f32.mrb[0].mxu0
      %v411 = vadd.f32 0.0, %v410
      %v412 = vpop.f32.mrb[0].mxu0
      %413 = vmatprep.mubr.f32.mxu0 0.0
      %414 = vmatmul.mubr.f32.gmra.mrb[0].mxu0 %v319
      %v415 = vpop.f32.mrb[0].mxu0
      %v416 = vadd.f32 0.0, %v415
      %v417 = vpop.f32.mrb[0].mxu0
      %418 = vmatprep.mubr.f32.mxu0 0.0
      %419 = vmatmul.mubr.f32.gmra.mrb[0].mxu0 %v322
      %v420 = vpop.f32.mrb[0].mxu0
      %v421 = vadd.f32 0.0, %v420
      %v422 = vpop.f32.mrb[0].mxu0
      %423 = vmatprep.mubr.f32.mxu0 0.0
      %424 = vmatmul.mubr.f32.gmra.mrb[0].mxu0 %v325
      %v425 = vpop.f32.mrb[0].mxu0
      %v426 = vadd.f32 0.0, %v425
      %v427 = vpop.f32.mrb[0].mxu0
      %428 = vmatprep.mubr.f32.mxu0 0.0
      %429 = vmatmul.mubr.f32.gmra.mrb[0].mxu0 %v328
      %v430 = vpop.f32.mrb[0].mxu0
      %v431 = vadd.f32 0.0, %v430
      %v432 = vpop.f32.mrb[0].mxu0
      %433 = vdwg.mxu0
      %v435 = vsel %vm282, %v292, 0
      %v438 = vsel %vm282, %v293, 0
      %v441 = vsel %vm282, %v294, 0
      %v444 = vsel %vm282, %v295, 0
      %v447 = vsel %vm282, %v296, 0
      %v450 = vsel %vm282, %v297, 0
      %v453 = vsel %vm282, %v298, 0
      %v456 = vsel %vm330, %v299, 0
      %458 = vmatprep.subr.mxu0 0.0
      %459 = vmatpush1.msra.mxu0 %v456
      %460 = vmatprep.subr.mxu0 0.0
      %461 = vmatpush1.msra.mxu0 0.0
      %462 = vmatprep.subr.mxu0 0.0
      %463 = vmatpush1.msra.mxu0 0.0
      %464 = vmatprep.subr.mxu0 0.0
      %465 = vmatpush1.msra.mxu0 0.0
      %466 = vmatprep.subr.mxu0 0.0
      %467 = vmatpush1.msra.mxu0 0.0
      %468 = vmatprep.subr.mxu0 0.0
      %469 = vmatpush1.msra.mxu0 0.0
      %470 = vmatprep.subr.mxu0 0.0
      %471 = vmatpush1.msra.mxu0 0.0
      %472 = vmatprep.subr.mxu0 0.0
      %473 = vmatpush1.msra.mxu0 0.0
      %474 = vmatprep.subr.mxu0 0.0
      %475 = vmatpush1.msra.mxu0 0.0
      %476 = vmatprep.subr.mxu0 0.0
      %477 = vmatpush1.msra.mxu0 0.0
      %478 = vmatprep.subr.mxu0 0.0
      %479 = vmatpush1.msra.mxu0 0.0
      %480 = vmatprep.subr.mxu0 0.0
      %481 = vmatpush1.msra.mxu0 0.0
      %482 = vmatprep.subr.mxu0 0.0
      %483 = vmatpush1.msra.mxu0 0.0
      %484 = vmatprep.subr.mxu0 0.0
      %485 = vmatpush1.msra.mxu0 0.0
      %486 = vmatprep.subr.mxu0 0.0
      %487 = vmatpush1.msra.mxu0 0.0
      %488 = vmatprep.subr.mxu0 0.0
      %489 = vmatpush1.msra.mxu0 0.0
      %490 = vmatprep.subr.mxu0 0.0
      %491 = vmatpush1.msra.mxu0 0.0
      %492 = vmatprep.subr.mxu0 0.0
      %493 = vmatpush1.msra.mxu0 0.0
      %494 = vmatprep.subr.mxu0 0.0
      %495 = vmatpush1.msra.mxu0 0.0
      %496 = vmatprep.subr.mxu0 0.0
      %497 = vmatpush1.msra.mxu0 0.0
      %498 = vmatprep.subr.mxu0 0.0
      %499 = vmatpush1.msra.mxu0 0.0
      %500 = vmatprep.subr.mxu0 0.0
      %501 = vmatpush1.msra.mxu0 0.0
      %502 = vmatprep.subr.mxu0 0.0
      %503 = vmatpush1.msra.mxu0 0.0
      %504 = vmatprep.subr.mxu0 0.0
      %505 = vmatpush1.msra.mxu0 0.0
      %506 = vmatprep.subr.mxu0 0.0
      %507 = vmatpush1.msra.mxu0 0.0
      %508 = vmatprep.subr.mxu0 0.0
      %509 = vmatpush1.msra.mxu0 0.0
      %510 = vmatprep.subr.mxu0 0.0
      %511 = vmatpush1.msra.mxu0 0.0
      %512 = vmatprep.subr.mxu0 0.0
      %513 = vmatpush1.msra.mxu0 0.0
      %514 = vmatprep.subr.mxu0 0.0
      %515 = vmatpush1.msra.mxu0 0.0
      %516 = vmatprep.subr.mxu0 0.0
      %517 = vmatpush1.msra.mxu0 0.0
      %518 = vmatprep.subr.mxu0 0.0
      %519 = vmatpush1.msra.mxu0 0.0
      %520 = vmatprep.subr.mxu0 0.0
      %521 = vmatpush1.msra.mxu0 0.0
      %522 = vmatprep.mubr.f32.mxu0 0.0
      %523 = vmatmul.mubr.f32.gmra.mrb[0].mxu0 %v435
      %v524 = vpop.f32.mrb[0].mxu0
      %v525 = vadd.f32 %v401, %v524
      %v526 = vpop.f32.mrb[0].mxu0
      %527 = vmatprep.mubr.f32.mxu0 0.0
      %528 = vmatmul.mubr.f32.gmra.mrb[0].mxu0 %v438
      %v529 = vpop.f32.mrb[0].mxu0
      %v530 = vadd.f32 %v406, %v529
      %v531 = vpop.f32.mrb[0].mxu0
      %532 = vmatprep.mubr.f32.mxu0 0.0
      %533 = vmatmul.mubr.f32.gmra.mrb[0].mxu0 %v441
      %v534 = vpop.f32.mrb[0].mxu0
      %v535 = vadd.f32 %v411, %v534
      %v536 = vpop.f32.mrb[0].mxu0
      %537 = vmatprep.mubr.f32.mxu0 0.0
      %538 = vmatmul.mubr.f32.gmra.mrb[0].mxu0 %v444
      %v539 = vpop.f32.mrb[0].mxu0
      %v540 = vadd.f32 %v416, %v539
      %v541 = vpop.f32.mrb[0].mxu0
      %542 = vmatprep.mubr.f32.mxu0 0.0
      %543 = vmatmul.mubr.f32.gmra.mrb[0].mxu0 %v447
      %v544 = vpop.f32.mrb[0].mxu0
      %v545 = vadd.f32 %v421, %v544
      %v546 = vpop.f32.mrb[0].mxu0
      %547 = vmatprep.mubr.f32.mxu0 0.0
      %548 = vmatmul.mubr.f32.gmra.mrb[0].mxu0 %v450
      %v549 = vpop.f32.mrb[0].mxu0
      %v550 = vadd.f32 %v426, %v549
      %v551 = vpop.f32.mrb[0].mxu0
      %552 = vmatprep.mubr.f32.mxu0 0.0
      %553 = vmatmul.mubr.f32.gmra.mrb[0].mxu0 %v453
      %v554 = vpop.f32.mrb[0].mxu0
      %v555 = vadd.f32 %v431, %v554
      %v556 = vpop.f32.mrb[0].mxu0
      %557 = vdwg.mxu0
      %vm558 = vcmask 261120
      %559 = vst.msk [vmem:[%s273] sm:$0xff] %vm558, %v525
      %560 = vst.msk [vmem:[%s273 + $0x8] sm:$0xff] %vm558, %v530
      %561 = vst.msk [vmem:[%s273 + $0x10] sm:$0xff] %vm558, %v535
      %562 = vst.msk [vmem:[%s273 + $0x18] sm:$0xff] %vm558, %v540
      %563 = vst.msk [vmem:[%s273 + $0x20] sm:$0xff] %vm558, %v545
      %564 = vst.msk [vmem:[%s273 + $0x28] sm:$0xff] %vm558, %v550
      %565 = vst.msk [vmem:[%s273 + $0x30] sm:$0xff] %vm558, %v555
      %s566 = smul.u32 7, %s19
      %p567 = scmp.lt.s32.totalorder %s18, 1
      %s568 = scalar_select %p567, %s18, 1
      %p569 = scmp.lt.s32.totalorder %s566, 6
      %s570 = scalar_select %p569, %s566, 6
      %s571 = smul.addr %s568, 7
      %s572 = sadd.s32 %s570, %s571
      %s573 = smul.addr %s572, 8
      %s574 = scalar_lea.vmem %s3, %s573
      // Predicated region
      $region33: #{tpu_custom_call.1} parent=31 // pred_check
        %p575 = pneg %p127
      $region34: #{tpu_custom_call.1} parent=31 // pred_check_branch
        %577 = sbr.rel (%p575) target = $region36
      $region35: #{tpu_custom_call.1} parent=31 // pred_region
        %s578 = smul.u32 7, %s19
      $region36: #{tpu_custom_call.1} parent=31 // pred_fallthru
        _
    $region32: #{tpu_custom_call.1} parent=5 // pred_fallthru
      _
    %p579 = scmp.le.s32.totalorder 2, %s9
    // Predicated region
    $region37: #{tpu_custom_call.1} parent=5 // pred_check
      %p580 = pneg %p579
    $region38: #{tpu_custom_call.1} parent=5 // pred_check_branch
      %582 = sbr.rel (%p580) target = $region40
    $region39: #{tpu_custom_call.1} parent=5 // pred_region
      %s583 = ssub.s32 %s9, 2
      // Predicated region
      $region41: #{tpu_custom_call.1} parent=39 // pred_check
        %p584 = pneg %p133
      $region42: #{tpu_custom_call.1} parent=39 // pred_check_branch
        %586 = sbr.rel (%p584) target = $region44
      $region43: #{tpu_custom_call.1} parent=39 // pred_region
        %s587 = smul.u32 7, %s21
        %p588 = scmp.lt.s32.totalorder %s20, 1
        %s589 = scalar_select %p588, %s20, 1
        %p590 = scmp.lt.s32.totalorder %s587, 6
        %s591 = scalar_select %p590, %s587, 6
        %s592 = smul.addr %s589, 7
        %s593 = sadd.s32 %s591, %s592
        %s594 = smul.addr %s593, 8
        %s595 = scalar_lea.vmem %s3, %s594
      $region44: #{tpu_custom_call.1} parent=39 // pred_fallthru
        _
    $region40: #{tpu_custom_call.1} parent=5 // pred_fallthru
      _
  $region6: #{tpu_custom_call.1} parent=0 // loop_footer
    %s13 = sadd.s32 1, %s9
  $region7: #{tpu_custom_call.1} parent=0 // loop_footer_branch
    %8 = sbr.rel target = $region3
  $region8: #{tpu_custom_call.1} parent=0 // loop_exit
    _

</llo_original>
